<compile_context>
chip_gen: v7x
topology: tpu7x:2x2x1
jax: 0.10.0
libtpu: 0.0.40
codegen_flags: <defaults>
</compile_context>

<pallas_src>
from functools import partial

import jax
import jax.numpy as jnp
from jax.experimental import pallas as pl
from jax.experimental.pallas import tpu as pltpu


_GELU_C0 = 0.7978845608028654              # sqrt(2/pi)
_GELU_C1 = 0.7978845608028654 * 0.044715   # folded: sqrt(2/pi) * 0.044715


def _round_up(x, m):
    return (x + m - 1) // m * m


def _tpu_vmem_capacity_bytes():
    """Physical VMEM per core; conservative (v7x, 64 MiB) fallback if the query fails."""
    try:
        return int(pltpu.get_tpu_info().vmem_capacity_bytes)
    except Exception:
        return 64 << 20


def _largest_dividing_chunk(total, cap):
    """Largest multiple of 128 that divides `total` (itself a multiple of 128) and is <= cap."""
    cap = max(128, min(cap, total))
    best, t = 128, 128
    while t <= cap:
        if total % t == 0:
            best = t
        t += 128
    return best


def _select_tiles(M, Cp, Hp, tile_m, tile_h, psz, out_sz, budget):
    """Static (trace-time) tile selection under a VMEM budget.  Cp, Hp already padded."""
    Mp16 = _round_up(M, 16)              # bf16 packs 16 rows per packed sublane pair

    # Big M tiles => high arithmetic intensity on the weight stream.
    tm = min(tile_m, Mp16)
    # v7x has 2 TensorCores; keep >=2 tiles on the "parallel" M axis when M is
    # large enough that splitting is worthwhile.
    if tm == Mp16 and M >= 512:
        tm = _round_up(-(-Mp16 // 2), 16)

    def est(tm_, th_):
        return (2 * tm_ * Cp * psz           # x tile (double-buffered)
                + 2 * 2 * Cp * th_ * psz     # W_fc^T + W_proj^T chunks (double-buffered)
                + 2 * (th_ + Cp) * 4         # bias chunks
                + 2 * tm_ * Cp * out_sz      # output tile (double-buffered)
                + tm_ * Cp * 4               # f32 accumulator scratch
                + tm_ * th_ * (4 + psz))     # h (f32) + g (bf16) GELU intermediates

    # Full-weight residency: a single H step keeps both weight block indices
    # grid-invariant -> weights are DMA'd from HBM once for the whole call.
    if est(tm, Hp) <= budget:
        th = Hp
    else:
        th = _largest_dividing_chunk(Hp, min(tile_h, Hp))
        while est(tm, th) > budget and th > 256:
            th = _largest_dividing_chunk(Hp, th // 2)
        while est(tm, th) > budget and tm > 256:
            tm = max(256, _round_up(tm // 2, 16))

    Mp = _round_up(M, tm)
    return Mp, tm, th, est(tm, th)


def _mlp_kernel(x_ref, wfc_ref, bfc_ref, wproj_ref, bproj_ref, o_ref, acc_ref):
    # x_ref:     (tm, Cp)  bf16 activation tile (constant across the H axis)
    # wfc_ref:   (Cp, th)  bf16 chunk of W_fc^T   (in, out)
    # bfc_ref:   (1,  th)  f32 chunk of b_fc
    # wproj_ref: (th, Cp)  bf16 chunk of W_proj^T (in, out)
    # bproj_ref: (1,  Cp)  f32 b_proj
    # o_ref:     (tm, Cp)  output tile (written once, at the last H step)
    # acc_ref:   (tm, Cp)  f32 accumulator scratch
    h_idx = pl.program_id(1)

    @pl.when(h_idx == 0)
    def _():
        acc_ref[...] = jnp.zeros_like(acc_ref)

    # c_fc for this H chunk: MXU matmul with f32 accumulation, bias in f32.
    h = jnp.dot(x_ref[...], wfc_ref[...], preferred_element_type=jnp.float32)
    h = h + bfc_ref[...]

    # tanh-approx GELU == nn.GELU(approximate='tanh'); constants folded so the
    # polynomial is h*(C0 + C1*h*h) (one fewer VALU multiply).  tanh rides the
    # EUP slot.  Kept in f32 so it is also valid on v5e (no bf16 VALU/EUP).
    inner = h * (_GELU_C0 + _GELU_C1 * (h * h))
    g = (0.5 * h) * (1.0 + jnp.tanh(inner))

    # Partial c_proj for this H chunk, accumulated in f32.
    acc_ref[...] += jnp.dot(g.astype(wproj_ref.dtype), wproj_ref[...],
                            preferred_element_type=jnp.float32)

    @pl.when(h_idx == pl.num_programs(1) - 1)
    def _():
        o_ref[...] = (acc_ref[...] + bproj_ref[...]).astype(o_ref.dtype)


def prepare_mlp_params(w_fc, b_fc, w_proj, b_proj, *, param_dtype=jnp.bfloat16):
    """One-time weight prep: pad to (Cp,Hp)/(Hp,Cp), transpose to (in,out), cast to bf16.

    Kept out of the per-call hot path so the transpose/cast HBM traffic is not paid
    on every forward (it is comparable to the kernel's own weight traffic).
    """
    H, C = w_fc.shape
    assert w_proj.shape == (C, H) and b_fc.shape == (H,) and b_proj.shape == (C,)
    Cp = _round_up(C, 128)
    Hp = _round_up(H, 128)
    wfc_t = jnp.pad(w_fc, ((0, Hp - H), (0, Cp - C))).T.astype(param_dtype)       # (Cp, Hp)
    wproj_t = jnp.pad(w_proj, ((0, Cp - C), (0, Hp - H))).T.astype(param_dtype)   # (Hp, Cp)
    bfc2 = jnp.pad(b_fc, (0, Hp - H)).reshape(1, Hp).astype(jnp.float32)
    bproj2 = jnp.pad(b_proj, (0, Cp - C)).reshape(1, Cp).astype(jnp.float32)
    return wfc_t, bfc2, wproj_t, bproj2


@partial(jax.jit, static_argnames=("tile_m", "tile_h"))
def mlp_forward_prepared(x, wfc_t, bfc2, wproj_t, bproj2, *, tile_m=1024, tile_h=1024):
    """x: (B, T, C); remaining args from prepare_mlp_params."""
    B, T, C = x.shape
    Cp, Hp = wfc_t.shape
    assert wproj_t.shape == (Hp, Cp) and bfc2.shape == (1, Hp) and bproj2.shape == (1, Cp)
    assert Cp >= C and Cp == _round_up(C, 128)

    M = B * T
    param_dtype = wfc_t.dtype
    out_dtype = x.dtype
    psz = jnp.dtype(param_dtype).itemsize
    osz = jnp.dtype(out_dtype).itemsize

    # ---- static tile selection under a per-generation VMEM budget ----
    cap = _tpu_vmem_capacity_bytes()
    budget = min(int(0.75 * cap), 96 << 20)
    Mp, tm, th, est_bytes = _select_tiles(M, Cp, Hp, tile_m, tile_h, psz, osz, budget)

    # ---- per-call activation prep (proportional to activations, not weights) ----
    x2 = jnp.pad(x.reshape(M, C), ((0, Mp - M), (0, Cp - C))).astype(param_dtype)

    grid = (Mp // tm, Hp // th)
    weight_passes = 1 if th == Hp else grid[0]

    vmem_limit = max(8 << 20, min(int(0.9 * cap), int(1.3 * est_bytes) + (2 << 20)))

    cost = pl.CostEstimate(
        flops=4 * Mp * Cp * Hp,                                   # two matmuls, 2*M*K*N each
        transcendentals=Mp * Hp,                                  # tanh
        bytes_accessed=(Mp * Cp * psz                             # x read
                        + weight_passes * 2 * Cp * Hp * psz       # weight reads
                        + (Hp + Cp) * 4                           # biases
                        + Mp * Cp * osz),                         # output write
    )

    # TODO(synk): pipeline_mode=pl.Buffered(1) on the x / b_proj (and, when resident,
    # weight) blocks would free their unused second VMEM buffer for more tm headroom.
    out2 = pl.pallas_call(
        _mlp_kernel,
        out_shape=jax.ShapeDtypeStruct((Mp, Cp), out_dtype),
        grid_spec=pltpu.PrefetchScalarGridSpec(
            num_scalar_prefetch=0,
            grid=grid,
            in_specs=[
                pl.BlockSpec((tm, Cp), lambda i, h: (i, 0)),   # x tile (fixed over h)
                pl.BlockSpec((Cp, th), lambda i, h: (0, h)),   # W_fc^T chunk
                pl.BlockSpec((1, th),  lambda i, h: (0, h)),   # b_fc chunk
                pl.BlockSpec((th, Cp), lambda i, h: (h, 0)),   # W_proj^T chunk
                pl.BlockSpec((1, Cp),  lambda i, h: (0, 0)),   # b_proj
            ],
            out_specs=pl.BlockSpec((tm, Cp), lambda i, h: (i, 0)),
            scratch_shapes=[pltpu.VMEM((tm, Cp), jnp.float32)],
        ),
        compiler_params=pltpu.CompilerParams(
            dimension_semantics=("parallel", "arbitrary"),
            vmem_limit_bytes=vmem_limit,
        ),
        cost_estimate=cost,
    )(x2, wfc_t, bfc2, wproj_t, bproj2)

    return out2[:M, :C].reshape(B, T, C)


def mlp_forward(x, w_fc, b_fc, w_proj, b_proj, *, param_dtype=jnp.bfloat16, **tile_kw):
    """Convenience wrapper: PyTorch-layout (out,in) params -> forward (prep not cached)."""
    params = prepare_mlp_params(w_fc, b_fc, w_proj, b_proj, param_dtype=param_dtype)
    return mlp_forward_prepared(x, *params, **tile_kw)


def _reference_mlp(x, w_fc, b_fc, w_proj, b_proj):
    h = jnp.einsum("btc,hc->bth", x, w_fc) + b_fc
    c = 0.7978845608028654
    g = 0.5 * h * (1.0 + jnp.tanh(c * (h + 0.044715 * h ** 3)))
    y = jnp.einsum("bth,ch->btc", g, w_proj) + b_proj
    return y


if __name__ == "__main__":
    # Small config consistent with the module: n_embd = 32, batch = 2, seq = 8.
    B, T, C = 2, 8, 32
    H = 4 * C

    key = jax.random.PRNGKey(0)
    kx, kwf, kbf, kwp, kbp = jax.random.split(key, 5)

    x = jax.random.normal(kx, (B, T, C), dtype=jnp.float32)
    # PyTorch Linear weight layout: (out_features, in_features)
    w_fc = jax.random.normal(kwf, (H, C), dtype=jnp.float32) * 0.02
    b_fc = jax.random.normal(kbf, (H,), dtype=jnp.float32) * 0.02
    w_proj = jax.random.normal(kwp, (C, H), dtype=jnp.float32) * 0.02
    b_proj = jax.random.normal(kbp, (C,), dtype=jnp.float32) * 0.02

    # Prepare weights once (out of the hot path), then run the kernel.
    params = prepare_mlp_params(w_fc, b_fc, w_proj, b_proj)
    y = mlp_forward_prepared(x, *params)
    y = jax.block_until_ready(y)

    y_ref = _reference_mlp(x, w_fc, b_fc, w_proj, b_proj)
    assert y.shape == (B, T, C)
    # bf16 MXU inputs (f32 accumulation) -> bf16-appropriate tolerance.
    assert jnp.allclose(y, y_ref, atol=5e-3, rtol=5e-2), \
        float(jnp.max(jnp.abs(y - y_ref)))

    print("KERNEL_OK")
</pallas_src>

<mosaic_0001>
module attributes {stable_mosaic.version = 11 : i64} {
  func.func @_mlp_kernel(%arg0: i32, %arg1: i32, %arg2: memref<16x128xbf16, #tpu.memory_space<vmem>>, %arg3: memref<128x128xbf16, #tpu.memory_space<vmem>>, %arg4: memref<1x128xf32, #tpu.memory_space<vmem>>, %arg5: memref<128x128xbf16, #tpu.memory_space<vmem>>, %arg6: memref<1x128xf32, #tpu.memory_space<vmem>>, %arg7: memref<16x128xf32, #tpu.memory_space<vmem>>, %arg8: memref<16x128xf32, #tpu.memory_space<vmem>>) attributes {dimension_semantics = [#tpu.dimension_semantics<parallel>, #tpu.dimension_semantics<arbitrary>], iteration_bounds = array<i64: 1, 1>, scalar_prefetch = 0 : i64, scratch_operands = 1 : i64, tpu.core_type = #tpu.core_type<tc>, window_params = [{transform_indices = @transform_0, window_bounds = array<i64: 16, 128>}, {transform_indices = @transform_1, window_bounds = array<i64: 128, 128>}, {transform_indices = @transform_2, window_bounds = array<i64: 1, 128>}, {transform_indices = @transform_3, window_bounds = array<i64: 128, 128>}, {pipeline_mode = #tpu.pipeline_mode<synchronous>, transform_indices = @transform_4, window_bounds = array<i64: 1, 128>}, {transform_indices = @transform_5, window_bounds = array<i64: 16, 128>}]} {
    %c0_i32 = arith.constant 0 : i32
    %0 = arith.cmpi eq, %arg1, %c0_i32 : i32
    %1 = arith.extui %0 : i1 to i32
    %c0_i32_0 = arith.constant 0 : i32
    %2 = arith.cmpi ne, %1, %c0_i32_0 : i32
    scf.if %2 {
      %cst_19 = arith.constant 0.000000e+00 : f32
      %30 = vector.broadcast %cst_19 : f32 to vector<16x128xf32>
      %c0_20 = arith.constant 0 : index
      %c0_21 = arith.constant 0 : index
      %31 = vector.load %arg8[%c0_20, %c0_21] : memref<16x128xf32, #tpu.memory_space<vmem>>, vector<16x128xf32>
      tpu.vector_store %arg8[%c0_20, %c0_21], %30 {strides = array<i32>} : memref<16x128xf32, #tpu.memory_space<vmem>>, vector<16x128xf32>,
    } else {
    }
    %c0 = arith.constant 0 : index
    %c0_1 = arith.constant 0 : index
    %3 = vector.load %arg2[%c0, %c0_1] : memref<16x128xbf16, #tpu.memory_space<vmem>>, vector<16x128xbf16>
    %c0_2 = arith.constant 0 : index
    %c0_3 = arith.constant 0 : index
    %4 = vector.load %arg3[%c0_2, %c0_3] : memref<128x128xbf16, #tpu.memory_space<vmem>>, vector<128x128xbf16>
    %cst = arith.constant dense<0.000000e+00> : vector<16x128xf32>
    %5 = tpu.matmul %3, %4, %cst {dimension_numbers = #tpu.dot_dimension_numbers<[1], [0], [0], [1], [0, 0, 1, 1], [], []>} : vector<16x128xbf16>, vector<128x128xbf16>, vector<16x128xf32> -> vector<16x128xf32>
    %c0_4 = arith.constant 0 : index
    %c0_5 = arith.constant 0 : index
    %6 = vector.load %arg4[%c0_4, %c0_5] : memref<1x128xf32, #tpu.memory_space<vmem>>, vector<1x128xf32>
    %7 = vector.broadcast %6 : vector<1x128xf32> to vector<16x128xf32>
    %8 = arith.addf %5, %7 : vector<16x128xf32>
    %9 = arith.mulf %8, %8 : vector<16x128xf32>
    %cst_6 = arith.constant 0.0356774069 : f32
    %10 = vector.broadcast %cst_6 : f32 to vector<16x128xf32>
    %11 = arith.mulf %10, %9 : vector<16x128xf32>
    %cst_7 = arith.constant 0.797884583 : f32
    %12 = vector.broadcast %cst_7 : f32 to vector<16x128xf32>
    %13 = arith.addf %12, %11 : vector<16x128xf32>
    %14 = arith.mulf %8, %13 : vector<16x128xf32>
    %cst_8 = arith.constant 5.000000e-01 : f32
    %15 = vector.broadcast %cst_8 : f32 to vector<16x128xf32>
    %16 = arith.mulf %15, %8 : vector<16x128xf32>
    %17 = math.tanh %14 : vector<16x128xf32>
    %cst_9 = arith.constant 1.000000e+00 : f32
    %18 = vector.broadcast %cst_9 : f32 to vector<16x128xf32>
    %19 = arith.addf %18, %17 : vector<16x128xf32>
    %20 = arith.mulf %16, %19 : vector<16x128xf32>
    %c0_10 = arith.constant 0 : index
    %c0_11 = arith.constant 0 : index
    %21 = vector.load %arg8[%c0_10, %c0_11] : memref<16x128xf32, #tpu.memory_space<vmem>>, vector<16x128xf32>
    %22 = arith.truncf %20 : vector<16x128xf32> to vector<16x128xbf16>
    %c0_12 = arith.constant 0 : index
    %c0_13 = arith.constant 0 : index
    %23 = vector.load %arg5[%c0_12, %c0_13] : memref<128x128xbf16, #tpu.memory_space<vmem>>, vector<128x128xbf16>
    %cst_14 = arith.constant dense<0.000000e+00> : vector<16x128xf32>
    %24 = tpu.matmul %22, %23, %cst_14 {dimension_numbers = #tpu.dot_dimension_numbers<[1], [0], [0], [1], [0, 0, 1, 1], [], []>} : vector<16x128xbf16>, vector<128x128xbf16>, vector<16x128xf32> -> vector<16x128xf32>
    %25 = arith.addf %21, %24 : vector<16x128xf32>
    %c0_15 = arith.constant 0 : index
    %c0_16 = arith.constant 0 : index
    %26 = vector.load %arg8[%c0_15, %c0_16] : memref<16x128xf32, #tpu.memory_space<vmem>>, vector<16x128xf32>
    tpu.vector_store %arg8[%c0_15, %c0_16], %25 {strides = array<i32>} : memref<16x128xf32, #tpu.memory_space<vmem>>, vector<16x128xf32>,
    %c0_i32_17 = arith.constant 0 : i32
    %27 = arith.cmpi eq, %arg1, %c0_i32_17 : i32
    %28 = arith.extui %27 : i1 to i32
    %c0_i32_18 = arith.constant 0 : i32
    %29 = arith.cmpi ne, %28, %c0_i32_18 : i32
    scf.if %29 {
      %c0_19 = arith.constant 0 : index
      %c0_20 = arith.constant 0 : index
      %30 = vector.load %arg8[%c0_19, %c0_20] : memref<16x128xf32, #tpu.memory_space<vmem>>, vector<16x128xf32>
      %c0_21 = arith.constant 0 : index
      %c0_22 = arith.constant 0 : index
      %31 = vector.load %arg6[%c0_21, %c0_22] : memref<1x128xf32, #tpu.memory_space<vmem>>, vector<1x128xf32>
      %32 = vector.broadcast %31 : vector<1x128xf32> to vector<16x128xf32>
      %33 = arith.addf %30, %32 : vector<16x128xf32>
      %c0_23 = arith.constant 0 : index
      %c0_24 = arith.constant 0 : index
      %34 = vector.load %arg7[%c0_23, %c0_24] : memref<16x128xf32, #tpu.memory_space<vmem>>, vector<16x128xf32>
      tpu.vector_store %arg7[%c0_23, %c0_24], %33 {strides = array<i32>} : memref<16x128xf32, #tpu.memory_space<vmem>>, vector<16x128xf32>,
    } else {
    }
    return
  }
  func.func @transform_0(%arg0: i32, %arg1: i32) -> (i32, i32) {
    %c0_i32 = arith.constant 0 : i32
    %c0_i32_0 = arith.constant 0 : i32
    return %arg0, %c0_i32 : i32, i32
  }
  func.func @transform_1(%arg0: i32, %arg1: i32) -> (i32, i32) {
    %c0_i32 = arith.constant 0 : i32
    %c0_i32_0 = arith.constant 0 : i32
    return %c0_i32, %arg1 : i32, i32
  }
  func.func @transform_2(%arg0: i32, %arg1: i32) -> (i32, i32) {
    %c0_i32 = arith.constant 0 : i32
    %c0_i32_0 = arith.constant 0 : i32
    return %c0_i32, %arg1 : i32, i32
  }
  func.func @transform_3(%arg0: i32, %arg1: i32) -> (i32, i32) {
    %c0_i32 = arith.constant 0 : i32
    %c0_i32_0 = arith.constant 0 : i32
    return %arg1, %c0_i32 : i32, i32
  }
  func.func @transform_4(%arg0: i32, %arg1: i32) -> (i32, i32) {
    %c0_i32 = arith.constant 0 : i32
    %c0_i32_0 = arith.constant 0 : i32
    %c0_i32_1 = arith.constant 0 : i32
    return %c0_i32, %c0_i32_0 : i32, i32
  }
  func.func @transform_5(%arg0: i32, %arg1: i32) -> (i32, i32) {
    %c0_i32 = arith.constant 0 : i32
    %c0_i32_0 = arith.constant 0 : i32
    return %arg0, %c0_i32 : i32, i32
  }
}

</mosaic_0001>

<llo_original>
// kernel: mlp_forward_prepared.1
$region0: #{mlp_forward_prepared.1}
  #allocation0 [shape = 'u32[]', space=smem, size = 0x4, offset = 0x4, fixed_abs, tag = 'smem constant byte address 0x4 - core index']
  #allocation1 [shape = 'u32[144,128]{1,0:T(1,128)}', space=vmem, size = 0x12000, scoped, tag = 'internal scratch']
  #allocation2 [shape = 'f32[16,128]{1,0:T(8,128)}', space=vmem, size = 0x2000, scoped, tag = 'scratch operand']
  %s0 = inlined_call_operand.vmem [shape: bf16[16,128], index: 0, kind: input, shape index: {}]
  %s1 = inlined_call_operand.hbm [shape: bf16[128,128], index: 1, kind: input, shape index: {}]
  %s2 = inlined_call_operand.vmem [shape: f32[1,128], index: 2, kind: input, shape index: {}]
  %s3 = inlined_call_operand.hbm [shape: bf16[128,128], index: 3, kind: input, shape index: {}]
  %s4 = inlined_call_operand.vmem [shape: f32[1,128], index: 4, kind: input, shape index: {}]
  %s5 = inlined_call_operand.vmem [shape: f32[16,128], index: 5, kind: output, shape index: {}]
  %s6 = sld [smem:[#allocation0]]
  $region46: #{mlp_forward_prepared.1} parent=0
    _
  %s8 = ssub.s32 1, %s6
  %s9 = scalar_select 0, %s8, %s6
  $region1: #{mlp_forward_prepared.1} parent=0
    #allocation3 [shape = 'u8[32768]{0}', space=vmem, size = 0x8000, scoped, tag = 'input window, operand 1, single buffered']
    #allocation4 [shape = 's32[1]{0}', space=sflag, size = 0x4, scoped, tag = 'scoped memory for mlp_forward_prepared.1']
    #allocation5 [shape = 'u8[32768]{0}', space=vmem, size = 0x8000, scoped, tag = 'input window, operand 3, single buffered']
    #allocation6 [shape = 's32[1]{0}', space=sflag, size = 0x4, scoped, tag = 'scoped memory for mlp_forward_prepared.1']
    %10 = vsyncpa [#allocation4], 0
    %11 = vsyncpa [#allocation6], 0
    // Predicated region
    $region2: #{mlp_forward_prepared.1} parent=1 // pred_check
      _
    $region3: #{mlp_forward_prepared.1} parent=1 // pred_check_branch
      %13 = sbr.rel (0) target = $region5
    $region4: #{mlp_forward_prepared.1} parent=1 // pred_region
      _
    $region5: #{mlp_forward_prepared.1} parent=1 // pred_fallthru
      _
    // Predicated region
    $region6: #{mlp_forward_prepared.1} parent=1 // pred_check
      _
    $region7: #{mlp_forward_prepared.1} parent=1 // pred_check_branch
      %15 = sbr.rel (0) target = $region9
    $region8: #{mlp_forward_prepared.1} parent=1 // pred_region
      %s17 = ssub.s32 1024, 1024
      %18 = vsyncadd [#allocation4], %s17
      %s19 = sshll.u32 [#allocation3], 4
      %s20 = int_to_ptr.vmem [resolvable:$true] %s19
      %25 = dma.hbm_to_vmem [thread:$0]  %s1, 1024, %s20, [#allocation4], 64, 64, 4
    $region9: #{mlp_forward_prepared.1} parent=1 // pred_fallthru
      _
    // Predicated region
    $region10: #{mlp_forward_prepared.1} parent=1 // pred_check
      _
    $region11: #{mlp_forward_prepared.1} parent=1 // pred_check_branch
      %27 = sbr.rel (0) target = $region13
    $region12: #{mlp_forward_prepared.1} parent=1 // pred_region
      _
    $region13: #{mlp_forward_prepared.1} parent=1 // pred_fallthru
      _
    // Predicated region
    $region14: #{mlp_forward_prepared.1} parent=1 // pred_check
      _
    $region15: #{mlp_forward_prepared.1} parent=1 // pred_check_branch
      %29 = sbr.rel (0) target = $region17
    $region16: #{mlp_forward_prepared.1} parent=1 // pred_region
      %s31 = ssub.s32 1024, 1024
      %32 = vsyncadd [#allocation6], %s31
      %s33 = sshll.u32 [#allocation5], 4
      %s34 = int_to_ptr.vmem [resolvable:$true] %s33
      %39 = dma.hbm_to_vmem [thread:$0]  %s3, 1024, %s34, [#allocation6], 64, 64, 4
    $region17: #{mlp_forward_prepared.1} parent=1 // pred_fallthru
      _
    // Predicated region
    $region18: #{mlp_forward_prepared.1} parent=1 // pred_check
      _
    $region19: #{mlp_forward_prepared.1} parent=1 // pred_check_branch
      %41 = sbr.rel (0) target = $region21
    $region20: #{mlp_forward_prepared.1} parent=1 // pred_region
      _
    $region21: #{mlp_forward_prepared.1} parent=1 // pred_fallthru
      _
    // Predicated region
    $region22: #{mlp_forward_prepared.1} parent=1 // pred_check
      _
    $region23: #{mlp_forward_prepared.1} parent=1 // pred_check_branch
      %43 = sbr.rel (0) target = $region25
    $region24: #{mlp_forward_prepared.1} parent=1 // pred_region
      %44 = dma.done [#allocation4], 1024
    $region25: #{mlp_forward_prepared.1} parent=1 // pred_fallthru
      _
    // Predicated region
    $region26: #{mlp_forward_prepared.1} parent=1 // pred_check
      _
    $region27: #{mlp_forward_prepared.1} parent=1 // pred_check_branch
      %46 = sbr.rel (0) target = $region29
    $region28: #{mlp_forward_prepared.1} parent=1 // pred_region
      %47 = dma.done [#allocation6], 1024
    $region29: #{mlp_forward_prepared.1} parent=1 // pred_fallthru
      _
    %p49 = scmp.eq.s32.totalorder 0, 0
    // Predicated region
    $region30: #{mlp_forward_prepared.1} parent=1 // pred_check
      %p50 = pneg %p49
    $region31: #{mlp_forward_prepared.1} parent=1 // pred_check_branch
      %52 = sbr.rel (%p50) target = $region33
    $region32: #{mlp_forward_prepared.1} parent=1 // pred_region
      %53 = vst [vmem:[#allocation2] sm:$0xff] 0.0
      %54 = vst [vmem:[#allocation2 + $0x8] sm:$0xff] 0.0
    $region33: #{mlp_forward_prepared.1} parent=1 // pred_fallthru
      _
    %v55 = vld [vmem:[%s0] sm:$0xf]
    %v56 = vld [vmem:[%s0 + $0x4] sm:$0xf]
    %v57 = vld [vmem:[#allocation3] sm:$0xf]
    %v58 = vld [vmem:[#allocation3 + $0x4] sm:$0xf]
    %v59 = vld [vmem:[#allocation3 + $0x8] sm:$0xf]
    %v60 = vld [vmem:[#allocation3 + $0xc] sm:$0xf]
    %v61 = vld [vmem:[#allocation3 + $0x10] sm:$0xf]
    %v62 = vld [vmem:[#allocation3 + $0x14] sm:$0xf]
    %v63 = vld [vmem:[#allocation3 + $0x18] sm:$0xf]
    %v64 = vld [vmem:[#allocation3 + $0x1c] sm:$0xf]
    %v65 = vld [vmem:[#allocation3 + $0x20] sm:$0xf]
    %v66 = vld [vmem:[#allocation3 + $0x24] sm:$0xf]
    %v67 = vld [vmem:[#allocation3 + $0x28] sm:$0xf]
    %v68 = vld [vmem:[#allocation3 + $0x2c] sm:$0xf]
    %v69 = vld [vmem:[#allocation3 + $0x30] sm:$0xf]
    %v70 = vld [vmem:[#allocation3 + $0x34] sm:$0xf]
    %v71 = vld [vmem:[#allocation3 + $0x38] sm:$0xf]
    %v72 = vld [vmem:[#allocation3 + $0x3c] sm:$0xf]
    %v73 = vld [vmem:[%s2] sm:$0x1]
    %v75 = vlaneseq
    %v76 = vshrl.u32 %v75, 7
    %v77 = vsub.s32 0, %v76
    %v78 = vrot.slane %v73, %v77
    %v82 = vunpack.c.l.b16 %v55
    %v83 = vunpack.c.l.b16 %v56
    %v84 = vpack.c.b16 %v83, %v82
    %v102 = vunpack.c.l.b16 %v57
    %v103 = vunpack.c.l.b16 %v58
    %v104 = vunpack.c.l.b16 %v59
    %v105 = vunpack.c.l.b16 %v60
    %v106 = vunpack.c.l.b16 %v61
    %v107 = vunpack.c.l.b16 %v62
    %v108 = vunpack.c.l.b16 %v63
    %v109 = vunpack.c.l.b16 %v64
    %v110 = vunpack.c.l.b16 %v65
    %v111 = vunpack.c.l.b16 %v66
    %v112 = vunpack.c.l.b16 %v67
    %v113 = vunpack.c.l.b16 %v68
    %v114 = vunpack.c.l.b16 %v69
    %v115 = vunpack.c.l.b16 %v70
    %v116 = vunpack.c.l.b16 %v71
    %v117 = vunpack.c.l.b16 %v72
    %v118 = vpack.c.b16 %v103, %v102
    %v119 = vpack.c.b16 %v105, %v104
    %v120 = vpack.c.b16 %v107, %v106
    %v121 = vpack.c.b16 %v109, %v108
    %v122 = vpack.c.b16 %v111, %v110
    %v123 = vpack.c.b16 %v113, %v112
    %v124 = vpack.c.b16 %v115, %v114
    %v125 = vpack.c.b16 %v117, %v116
    %134 = vmatprep.subr.bf16.mxu0 0
    %135 = vmatpush1.bf16.msra.mxu0 %v118
    %136 = vmatprep.subr.bf16.mxu0 0
    %137 = vmatpush1.bf16.msra.mxu0 %v119
    %138 = vmatprep.subr.bf16.mxu0 0
    %139 = vmatpush1.bf16.msra.mxu0 %v120
    %140 = vmatprep.subr.bf16.mxu0 0
    %141 = vmatpush1.bf16.msra.mxu0 %v121
    %142 = vmatprep.subr.bf16.mxu0 0
    %143 = vmatpush1.bf16.msra.mxu0 %v122
    %144 = vmatprep.subr.bf16.mxu0 0
    %145 = vmatpush1.bf16.msra.mxu0 %v123
    %146 = vmatprep.subr.bf16.mxu0 0
    %147 = vmatpush1.bf16.msra.mxu0 %v124
    %148 = vmatprep.subr.bf16.mxu0 0
    %149 = vmatpush1.bf16.msra.mxu0 %v125
    %150 = vmatprep.subr.bf16.mxu0 0
    %151 = vmatpush1.bf16.msra.mxu0 0
    %152 = vmatprep.subr.bf16.mxu0 0
    %153 = vmatpush1.bf16.msra.mxu0 0
    %154 = vmatprep.subr.bf16.mxu0 0
    %155 = vmatpush1.bf16.msra.mxu0 0
    %156 = vmatprep.subr.bf16.mxu0 0
    %157 = vmatpush1.bf16.msra.mxu0 0
    %158 = vmatprep.subr.bf16.mxu0 0
    %159 = vmatpush1.bf16.msra.mxu0 0
    %160 = vmatprep.subr.bf16.mxu0 0
    %161 = vmatpush1.bf16.msra.mxu0 0
    %162 = vmatprep.subr.bf16.mxu0 0
    %163 = vmatpush1.bf16.msra.mxu0 0
    %164 = vmatprep.subr.bf16.mxu0 0
    %165 = vmatpush1.bf16.msra.mxu0 0
    %166 = vmatprep.mubr.bf16.mxu0 0
    %167 = vmatmul.mubr.bf16.gmra.mrb[0].mxu0 %v84
    %v168 = vpop.f32.mrb[0].mxu0
    %v169 = vadd.f32 %v78, %v168
    %v170 = vpop.f32.mrb[0].mxu0
    %v171 = vpop.f32.mrb[0].mxu0
    %v172 = vadd.f32 %v78, %v171
    %v173 = vpop.f32.mrb[0].mxu0
    %174 = vdwg.mxu0
    %v175 = vmul.f32 %v169, %v169
    %v176 = vmul.f32 %v172, %v172
    %v177 = vmul.f32 %v175, 0.035677407
    %v178 = vmul.f32 %v176, 0.035677407
    %v179 = vadd.f32 %v177, 0.7978846
    %v180 = vadd.f32 %v178, 0.7978846
    %v181 = vmul.f32 %v169, %v179
    %v182 = vmul.f32 %v172, %v180
    %v183 = vmul.f32 %v169, 0.5
    %v184 = vmul.f32 %v172, 0.5
    %v185 = vtanh.pop %v181
    %v186 = vtanh.pop %v182
    %v187 = vadd.f32 %v185, 1.0
    %v188 = vadd.f32 %v186, 1.0
    %v189 = vmul.f32 %v183, %v187
    %v190 = vmul.f32 %v184, %v188
    %v191 = vld [vmem:[#allocation2] sm:$0xff]
    %v192 = vld [vmem:[#allocation2 + $0x8] sm:$0xff]
    %v193 = vpack.c.bf16 %v190, %v189
    %v194 = vld [vmem:[#allocation5] sm:$0xf]
    %v195 = vld [vmem:[#allocation5 + $0x4] sm:$0xf]
    %v196 = vld [vmem:[#allocation5 + $0x8] sm:$0xf]
    %v197 = vld [vmem:[#allocation5 + $0xc] sm:$0xf]
    %v198 = vld [vmem:[#allocation5 + $0x10] sm:$0xf]
    %v199 = vld [vmem:[#allocation5 + $0x14] sm:$0xf]
    %v200 = vld [vmem:[#allocation5 + $0x18] sm:$0xf]
    %v201 = vld [vmem:[#allocation5 + $0x1c] sm:$0xf]
    %v202 = vld [vmem:[#allocation5 + $0x20] sm:$0xf]
    %v203 = vld [vmem:[#allocation5 + $0x24] sm:$0xf]
    %v204 = vld [vmem:[#allocation5 + $0x28] sm:$0xf]
    %v205 = vld [vmem:[#allocation5 + $0x2c] sm:$0xf]
    %v206 = vld [vmem:[#allocation5 + $0x30] sm:$0xf]
    %v207 = vld [vmem:[#allocation5 + $0x34] sm:$0xf]
    %v208 = vld [vmem:[#allocation5 + $0x38] sm:$0xf]
    %v209 = vld [vmem:[#allocation5 + $0x3c] sm:$0xf]
    %v226 = vunpack.c.l.b16 %v194
    %v227 = vunpack.c.l.b16 %v195
    %v228 = vunpack.c.l.b16 %v196
    %v229 = vunpack.c.l.b16 %v197
    %v230 = vunpack.c.l.b16 %v198
    %v231 = vunpack.c.l.b16 %v199
    %v232 = vunpack.c.l.b16 %v200
    %v233 = vunpack.c.l.b16 %v201
    %v234 = vunpack.c.l.b16 %v202
    %v235 = vunpack.c.l.b16 %v203
    %v236 = vunpack.c.l.b16 %v204
    %v237 = vunpack.c.l.b16 %v205
    %v238 = vunpack.c.l.b16 %v206
    %v239 = vunpack.c.l.b16 %v207
    %v240 = vunpack.c.l.b16 %v208
    %v241 = vunpack.c.l.b16 %v209
    %v242 = vpack.c.b16 %v227, %v226
    %v243 = vpack.c.b16 %v229, %v228
    %v244 = vpack.c.b16 %v231, %v230
    %v245 = vpack.c.b16 %v233, %v232
    %v246 = vpack.c.b16 %v235, %v234
    %v247 = vpack.c.b16 %v237, %v236
    %v248 = vpack.c.b16 %v239, %v238
    %v249 = vpack.c.b16 %v241, %v240
    %258 = vmatprep.subr.bf16.mxu0 0
    %259 = vmatpush1.bf16.msra.mxu0 %v242
    %260 = vmatprep.subr.bf16.mxu0 0
    %261 = vmatpush1.bf16.msra.mxu0 %v243
    %262 = vmatprep.subr.bf16.mxu0 0
    %263 = vmatpush1.bf16.msra.mxu0 %v244
    %264 = vmatprep.subr.bf16.mxu0 0
    %265 = vmatpush1.bf16.msra.mxu0 %v245
    %266 = vmatprep.subr.bf16.mxu0 0
    %267 = vmatpush1.bf16.msra.mxu0 %v246
    %268 = vmatprep.subr.bf16.mxu0 0
    %269 = vmatpush1.bf16.msra.mxu0 %v247
    %270 = vmatprep.subr.bf16.mxu0 0
    %271 = vmatpush1.bf16.msra.mxu0 %v248
    %272 = vmatprep.subr.bf16.mxu0 0
    %273 = vmatpush1.bf16.msra.mxu0 %v249
    %274 = vmatprep.subr.bf16.mxu0 0
    %275 = vmatpush1.bf16.msra.mxu0 0
    %276 = vmatprep.subr.bf16.mxu0 0
    %277 = vmatpush1.bf16.msra.mxu0 0
    %278 = vmatprep.subr.bf16.mxu0 0
    %279 = vmatpush1.bf16.msra.mxu0 0
    %280 = vmatprep.subr.bf16.mxu0 0
    %281 = vmatpush1.bf16.msra.mxu0 0
    %282 = vmatprep.subr.bf16.mxu0 0
    %283 = vmatpush1.bf16.msra.mxu0 0
    %284 = vmatprep.subr.bf16.mxu0 0
    %285 = vmatpush1.bf16.msra.mxu0 0
    %286 = vmatprep.subr.bf16.mxu0 0
    %287 = vmatpush1.bf16.msra.mxu0 0
    %288 = vmatprep.subr.bf16.mxu0 0
    %289 = vmatpush1.bf16.msra.mxu0 0
    %290 = vmatprep.mubr.bf16.mxu0 0
    %291 = vmatmul.mubr.bf16.gmra.mrb[0].mxu0 %v193
    %v292 = vpop.f32.mrb[0].mxu0
    %v293 = vadd.f32 0.0, %v292
    %v294 = vpop.f32.mrb[0].mxu0
    %v295 = vpop.f32.mrb[0].mxu0
    %v296 = vadd.f32 0.0, %v295
    %v297 = vpop.f32.mrb[0].mxu0
    %298 = vdwg.mxu0
    %v299 = vadd.f32 %v191, %v293
    %v300 = vadd.f32 %v192, %v296
    %301 = vst [vmem:[#allocation2] sm:$0xff] %v299
    %302 = vst [vmem:[#allocation2 + $0x8] sm:$0xff] %v300
    // Predicated region
    $region34: #{mlp_forward_prepared.1} parent=1 // pred_check
      %p303 = pneg %p49
    $region35: #{mlp_forward_prepared.1} parent=1 // pred_check_branch
      %305 = sbr.rel (%p303) target = $region37
    $region36: #{mlp_forward_prepared.1} parent=1 // pred_region
      %v306 = vld [vmem:[#allocation2] sm:$0xff]
      %v307 = vld [vmem:[#allocation2 + $0x8] sm:$0xff]
      %v308 = vld [vmem:[%s4] sm:$0x1]
      %v310 = vlaneseq
      %v311 = vshrl.u32 %v310, 7
      %v312 = vsub.s32 0, %v311
      %v313 = vrot.slane %v308, %v312
      %v315 = vadd.f32 %v306, %v313
      %v316 = vadd.f32 %v307, %v313
      %317 = vst [vmem:[%s5] sm:$0xff] %v315
      %318 = vst [vmem:[%s5 + $0x8] sm:$0xff] %v316
    $region37: #{mlp_forward_prepared.1} parent=1 // pred_fallthru
      _
    // Predicated region
    $region38: #{mlp_forward_prepared.1} parent=1 // pred_check
      _
    $region39: #{mlp_forward_prepared.1} parent=1 // pred_check_branch
      %320 = sbr.rel (0) target = $region41
    $region40: #{mlp_forward_prepared.1} parent=1 // pred_region
      _
    $region41: #{mlp_forward_prepared.1} parent=1 // pred_fallthru
      _
    // Predicated region
    $region42: #{mlp_forward_prepared.1} parent=1 // pred_check
      _
    $region43: #{mlp_forward_prepared.1} parent=1 // pred_check_branch
      %322 = sbr.rel (0) target = $region45
    $region44: #{mlp_forward_prepared.1} parent=1 // pred_region
      _
    $region45: #{mlp_forward_prepared.1} parent=1 // pred_fallthru
      _
    %323 = vsyncpa [#allocation4], 1
    %324 = vsyncpa [#allocation6], 1

</llo_original>
